<compile_context>
chip_gen: v6e
topology: v6e:2x2x1
jax: 0.10.0
libtpu: 0.0.40
codegen_flags: <defaults>
</compile_context>

<pallas_src>
import jax
import jax.numpy as jnp
from jax.experimental import pallas as pl
from jax.experimental.pallas import tpu as pltpu


def _make_sigmoid_mask_kernel(c, q, compute_dtype=jnp.float32):
    c = float(c)
    q = float(q)
    half_c = 0.5 * c
    half_q = 0.5 * q

    def kernel(x_ref, o_ref):
        x = x_ref[...].astype(compute_dtype)
        # c / (1 + exp(-q*x)) == 0.5*c * (1 + tanh(0.5*q*x))  -- one EUP op.
        o_ref[...] = (half_c * (1.0 + jnp.tanh(half_q * x))).astype(o_ref.dtype)

    return kernel


def _plan_layout(n, *, max_lane=2048, max_block_elems=1 << 19):
    """Pick a lane-dense (rows, lane) slab + row-tile for a flat length-n array."""
    # Round the flat length up to one f32 vreg (8 x 128 = 1024 elements).
    base = -(-n // 1024) * 1024
    lane = 128
    rows = base // lane
    # Widen the last (lane) dim -> longer contiguous stores / DMA descriptors,
    # while keeping the row count a multiple of 8 so multi-block tiling stays legal.
    while lane < max_lane and rows % 16 == 0:
        lane *= 2
        rows //= 2
    # Rows per block: the whole array if it fits the block budget (single block,
    # no pipelining), else large 8-aligned tiles (~MiB scale, well under VMEM).
    max_rows = max(8, (max_block_elems // lane) // 8 * 8)
    if rows <= max_rows:
        tile_rows = rows
        grid_rows = 1
    else:
        tile_rows = max_rows
        grid_rows = -(-rows // tile_rows)
        rows = grid_rows * tile_rows
    return rows, lane, tile_rows, grid_rows


def sigmoid_mask(x, c=1.0, q=4.0):
    """Applies c / (1 + exp(-q * x)) elementwise via a Pallas TPU kernel."""
    orig_shape = x.shape
    orig_dtype = x.dtype

    flat = x.reshape(-1)                 # keep native dtype end-to-end
    n = flat.shape[0]
    rows, lane, tile_rows, grid_rows = _plan_layout(n)
    padded_n = rows * lane
    if padded_n != n:
        flat = jnp.pad(flat, (0, padded_n - n))   # single pad pass
    x2d = flat.reshape(rows, lane)

    kernel = _make_sigmoid_mask_kernel(c, q)

    out2d = pl.pallas_call(
        kernel,
        out_shape=jax.ShapeDtypeStruct((rows, lane), orig_dtype),
        grid=(grid_rows,),
        in_specs=[pl.BlockSpec((tile_rows, lane), lambda i: (i, 0))],
        out_specs=pl.BlockSpec((tile_rows, lane), lambda i: (i, 0)),
        compiler_params=pltpu.CompilerParams(
            dimension_semantics=("parallel",)
        ),
    )(x2d)

    out = out2d.reshape(-1)
    if padded_n != n:
        out = out[:n]
    return out.reshape(orig_shape)


if __name__ == "__main__":
    key = jax.random.PRNGKey(0)
    # Shape consistent with a typical NCHW activation map.
    x = jax.random.normal(key, (2, 4, 16, 16), dtype=jnp.float32)

    c, q = 1.0, 4
    out = sigmoid_mask(x, c=c, q=float(q))
    out = jax.block_until_ready(out)

    # Reference (plain JAX) check of the exact PyTorch semantics.
    ref = c / (1.0 + jnp.exp(-q * x))
    assert out.shape == x.shape and out.dtype == x.dtype
    # tanh-based sigmoid differs from exp form only at float32 rounding level.
    assert jnp.allclose(out, ref, atol=1e-5, rtol=1e-4)

    print("KERNEL_OK")
</pallas_src>

<mosaic_0001>
module attributes {stable_mosaic.version = 11 : i64} {
  func.func @kernel(%arg0: i32, %arg1: memref<8x256xf32, #tpu.memory_space<vmem>>, %arg2: memref<8x256xf32, #tpu.memory_space<vmem>>) attributes {dimension_semantics = [#tpu.dimension_semantics<parallel>], iteration_bounds = array<i64: 1>, scalar_prefetch = 0 : i64, scratch_operands = 0 : i64, tpu.core_type = #tpu.core_type<tc>, window_params = [{transform_indices = @transform_0, window_bounds = array<i64: 8, 256>}, {transform_indices = @transform_1, window_bounds = array<i64: 8, 256>}]} {
    %c0 = arith.constant 0 : index
    %c0_0 = arith.constant 0 : index
    %0 = vector.load %arg1[%c0, %c0_0] : memref<8x256xf32, #tpu.memory_space<vmem>>, vector<8x256xf32>
    %cst = arith.constant 2.000000e+00 : f32
    %1 = vector.broadcast %cst : f32 to vector<8x256xf32>
    %2 = arith.mulf %1, %0 : vector<8x256xf32>
    %3 = math.tanh %2 : vector<8x256xf32>
    %cst_1 = arith.constant 1.000000e+00 : f32
    %4 = vector.broadcast %cst_1 : f32 to vector<8x256xf32>
    %5 = arith.addf %4, %3 : vector<8x256xf32>
    %cst_2 = arith.constant 5.000000e-01 : f32
    %6 = vector.broadcast %cst_2 : f32 to vector<8x256xf32>
    %7 = arith.mulf %6, %5 : vector<8x256xf32>
    %c0_3 = arith.constant 0 : index
    %c0_4 = arith.constant 0 : index
    %8 = vector.load %arg2[%c0_3, %c0_4] : memref<8x256xf32, #tpu.memory_space<vmem>>, vector<8x256xf32>
    tpu.vector_store %arg2[%c0_3, %c0_4], %7 {strides = array<i32>} : memref<8x256xf32, #tpu.memory_space<vmem>>, vector<8x256xf32>,
    return
  }
  func.func @transform_0(%arg0: i32) -> (i32, i32) {
    %c0_i32 = arith.constant 0 : i32
    %c0_i32_0 = arith.constant 0 : i32
    return %arg0, %c0_i32 : i32, i32
  }
  func.func @transform_1(%arg0: i32) -> (i32, i32) {
    %c0_i32 = arith.constant 0 : i32
    %c0_i32_0 = arith.constant 0 : i32
    return %arg0, %c0_i32 : i32, i32
  }
}

</mosaic_0001>

<llo_original>
// kernel: tpu_custom_call.1
$region0: #{tpu_custom_call.1}
  #allocation0 [shape = 'u32[]', space=smem, size = 0x4, offset = 0x4, fixed_abs, tag = 'smem constant byte address 0x4 - core index']
  #allocation1 [shape = 'u32[144,128]{1,0:T(1,128)}', space=vmem, size = 0x12000, scoped, tag = 'internal scratch']
  %s0 = inlined_call_operand.hbm [shape: f32[8,256], index: 0, kind: input, shape index: {}]
  %s1 = inlined_call_operand.hbm [shape: f32[8,256], index: 1, kind: output, shape index: {}]
  %s2 = sld [smem:[#allocation0]]
  $region18: #{tpu_custom_call.1} parent=0
    _
  %s4 = ssub.s32 1, %s2
  %s5 = scalar_select 0, %s4, %s2
  $region1: #{tpu_custom_call.1} parent=0
    #allocation2 [shape = 'u8[8192]{0}', space=vmem, size = 0x2000, scoped, tag = 'input window, operand 0, single buffered']
    #allocation3 [shape = 's32[1]{0}', space=sflag, size = 0x4, scoped, tag = 'scoped memory for tpu_custom_call.1']
    #allocation4 [shape = 's32[1]{0}', space=sflag, size = 0x4, scoped, tag = 'scoped memory for tpu_custom_call.1']
    #allocation5 [shape = 'u8[8192]{0}', space=vmem, size = 0x2000, scoped, tag = 'output window, operand 0, single buffered']
    %6 = vsyncpa [#allocation3], 0
    %7 = vsyncpa [#allocation4], 0
    // Predicated region
    $region2: #{tpu_custom_call.1} parent=1 // pred_check
      _
    $region3: #{tpu_custom_call.1} parent=1 // pred_check_branch
      %9 = sbr.rel (0) target = $region5
    $region4: #{tpu_custom_call.1} parent=1 // pred_region
      %s11 = ssub.s32 256, 256
      %12 = vsyncadd [#allocation3], %s11
      %s14 = sshll.u32 [#allocation2], 4
      %s15 = int_to_ptr.vmem [resolvable:$true] %s14
      %17 = dma.hbm_to_vmem [thread:$0]  %s0, 256, %s15, [#allocation3]
    $region5: #{tpu_custom_call.1} parent=1 // pred_fallthru
      _
    // Predicated region
    $region6: #{tpu_custom_call.1} parent=1 // pred_check
      _
    $region7: #{tpu_custom_call.1} parent=1 // pred_check_branch
      %19 = sbr.rel (0) target = $region9
    $region8: #{tpu_custom_call.1} parent=1 // pred_region
      %20 = dma.done [#allocation3], 256
    $region9: #{tpu_custom_call.1} parent=1 // pred_fallthru
      _
    %v21 = vld [vmem:[#allocation2] sm:$0xff]
    %v22 = vld [vmem:[#allocation2 + $0x8] sm:$0xff]
    %v23 = vmul.f32 %v21, 2.0
    %v24 = vmul.f32 %v22, 2.0
    %v25 = vtanh.pop %v23
    %v26 = vtanh.pop %v24
    %v27 = vadd.f32 %v25, 1.0
    %v28 = vadd.f32 %v26, 1.0
    %v29 = vmul.f32 %v27, 0.5
    %v30 = vmul.f32 %v28, 0.5
    %31 = vst [vmem:[#allocation5] sm:$0xff] %v29
    %32 = vst [vmem:[#allocation5 + $0x8] sm:$0xff] %v30
    // Predicated region
    $region10: #{tpu_custom_call.1} parent=1 // pred_check
      _
    $region11: #{tpu_custom_call.1} parent=1 // pred_check_branch
      %34 = sbr.rel (0) target = $region13
    $region12: #{tpu_custom_call.1} parent=1 // pred_region
      %s36 = ssub.s32 256, 256
      %37 = vsyncadd [#allocation4], %s36
      %s39 = sshll.u32 [#allocation5], 4
      %s40 = int_to_ptr.vmem [resolvable:$true] %s39
      %42 = dma.vmem_to_hbm [thread:$0]  %s40, 256, %s1, [#allocation4]
    $region13: #{tpu_custom_call.1} parent=1 // pred_fallthru
      _
    // Predicated region
    $region14: #{tpu_custom_call.1} parent=1 // pred_check
      _
    $region15: #{tpu_custom_call.1} parent=1 // pred_check_branch
      %44 = sbr.rel (0) target = $region17
    $region16: #{tpu_custom_call.1} parent=1 // pred_region
      %45 = dma.done [#allocation4], 256
    $region17: #{tpu_custom_call.1} parent=1 // pred_fallthru
      _
    %46 = vsyncpa [#allocation3], 1
    %47 = vsyncpa [#allocation4], 1

</llo_original>
